<compile_context>
chip_gen: v7x
topology: tpu7x:2x2x1
jax: 0.10.0
libtpu: 0.0.40
codegen_flags: <defaults>
</compile_context>

<pallas_src>
import functools

import jax
import jax.numpy as jnp
from jax.experimental import pallas as pl
from jax.experimental.pallas import tpu as pltpu

BN_EPS = 1e-5


def _cdiv(a, b):
    return (a + b - 1) // b


def _round_up(x, m):
    return _cdiv(x, m) * m


def critic_kernel(
    state_ref, action_ref,           # (TB, S) f32, (TB, A) f32 activation tiles
    w1_ref, w2s_ref, w3_ref,         # bf16 VMEM-resident weights (constant index_map)
    w2a_ref,                         # (A, H) f32 -- consumed on the VPU, kept f32
    vecs_ref,                        # (5, H) f32: [b1_folded, b2, b3, w4_row, b4_bcast]
    out_ref,                         # (TB, 1) f32
):
    f32 = jnp.float32
    bf16 = jnp.bfloat16

    # ---- fc1 (eval BN folded into W1/b1) + ReLU -----------------------------
    # MXU matmul in bf16, f32 accumulation; bias add + ReLU in f32 on the VPU.
    x = jnp.dot(state_ref[...].astype(bf16), w1_ref[...],
                preferred_element_type=f32)
    x = jnp.maximum(x + vecs_ref[0:1, :], 0.0)
    # dropout -> identity (eval mode)

    # ---- fc2 over concat([x, action]) + ReLU --------------------------------
    # cat([x, a]) @ W2 == x @ W2[:H] + a @ W2[H:].
    # State half (K = H) on the MXU in bf16; action half (K = A, tiny) as A
    # broadcast multiply-adds on the VPU (idle VALU slots), accumulating into h.
    h = jnp.dot(x.astype(bf16), w2s_ref[...], preferred_element_type=f32)
    a = action_ref[...]
    for k in range(a.shape[1]):                      # static unroll, A is small
        h = h + a[:, k:k + 1] * w2a_ref[k:k + 1, :]
    h = jnp.maximum(h + vecs_ref[1:2, :], 0.0)
    # dropout -> identity (eval mode)

    # ---- fc3 + ReLU ----------------------------------------------------------
    h = jnp.dot(h.astype(bf16), w3_ref[...], preferred_element_type=f32)
    h = jnp.maximum(h + vecs_ref[2:3, :], 0.0)

    # ---- fc4 -> (TB, 1): VPU multiply + XLU lane reduction -------------------
    q = jnp.sum(h * vecs_ref[3:4, :], axis=-1, keepdims=True) + vecs_ref[4:5, 0:1]
    out_ref[...] = q.astype(out_ref.dtype)


@functools.partial(jax.jit, static_argnames=("block_b",))
def critic_forward(state, action, params, *, block_b=1024):
    """state: (B, state_dim) f32, action: (B, action_dim) f32 -> (B, 1) f32."""
    B, S = state.shape
    A = action.shape[1]
    H = params["w1_t"].shape[1]
    f32, bf16 = jnp.float32, jnp.bfloat16

    # Fold eval-mode BatchNorm1d (running stats) and b1 into fc1 (f32 math),
    # then cast the MXU-bound weights to bf16.
    scale = params["bn_gamma"] * jax.lax.rsqrt(params["bn_var"] + BN_EPS)   # (1, H)
    w1_f = (params["w1_t"] * scale).astype(bf16)                            # (S, H)
    b1_f = (params["b1"] - params["bn_mean"]) * scale + params["bn_beta"]   # (1, H)
    w2s = params["w2s_t"].astype(bf16)                                      # (H, H)
    w3 = params["w3_t"].astype(bf16)                                        # (H, H)
    w2a = params["w2a_t"].astype(f32)          # stays f32: used on the VPU path

    # Pack the small (1, H) row vectors (+ b4 broadcast) into one resident array.
    vecs = jnp.concatenate(
        [b1_f, params["b2"], params["b3"], params["w4_t"].T,
         jnp.broadcast_to(params["b4"].reshape(1, 1), (1, H))],
        axis=0,
    )                                                                       # (5, H)

    # Batch tile: multiple of 8 sublanes, large enough to amortize per-step
    # overhead, capped so grid >= 2 whenever B allows (v7x dual-TC sharding).
    pB8 = _round_up(B, 8)
    tb_cap = max(8, _round_up(_cdiv(pB8, 2), 8))
    TB = _round_up(min(block_b, tb_cap), 8)
    pB = _round_up(pB8, TB)
    if pB != B:
        state = jnp.pad(state, ((0, pB - B), (0, 0)))
        action = jnp.pad(action, ((0, pB - B), (0, 0)))

    out = pl.pallas_call(
        critic_kernel,
        out_shape=jax.ShapeDtypeStruct((pB, 1), jnp.float32),
        grid=(pB // TB,),
        in_specs=[
            pl.BlockSpec((TB, S), lambda i: (i, 0)),     # state tile (pipelined)
            pl.BlockSpec((TB, A), lambda i: (i, 0)),     # action tile (pipelined)
            pl.BlockSpec((S, H), lambda i: (0, 0)),      # W1 bf16 (BN-folded, resident)
            pl.BlockSpec((H, H), lambda i: (0, 0)),      # W2 state half bf16 (resident)
            pl.BlockSpec((H, H), lambda i: (0, 0)),      # W3 bf16 (resident)
            pl.BlockSpec((A, H), lambda i: (0, 0)),      # W2 action half f32 (VPU path)
            pl.BlockSpec((5, H), lambda i: (0, 0)),      # packed biases + w4 row + b4
        ],
        out_specs=pl.BlockSpec((TB, 1), lambda i: (i, 0)),
        compiler_params=pltpu.CompilerParams(
            dimension_semantics=("parallel",),           # megacore shard on v7x
            vmem_limit_bytes=32 * 1024 * 1024,           # above v5e's 16 MiB default
        ),
    )(state, action, w1_f, w2s, w3, w2a, vecs)
    return out[:B]


def init_critic_params(key, state_dim, action_dim, hidden_dim):
    """Deterministic init mirroring nn.Linear / BatchNorm1d defaults."""
    keys = jax.random.split(key, 8)

    def linear(kw, kb, fan_in, fan_out):
        bound = 1.0 / jnp.sqrt(fan_in)
        w = jax.random.uniform(kw, (fan_out, fan_in), jnp.float32, -bound, bound)
        b = jax.random.uniform(kb, (fan_out,), jnp.float32, -bound, bound)
        return w, b

    w1, b1 = linear(keys[0], keys[1], state_dim, hidden_dim)
    w2, b2 = linear(keys[2], keys[3], hidden_dim + action_dim, hidden_dim)
    w3, b3 = linear(keys[4], keys[5], hidden_dim, hidden_dim)
    # fc4: uniform(-0.003, 0.003) per the module's __init__
    w4 = jax.random.uniform(keys[6], (1, hidden_dim), jnp.float32, -0.003, 0.003)
    b4 = jax.random.uniform(keys[7], (1,), jnp.float32, -0.003, 0.003)

    row = lambda v: v.reshape(1, -1)  # (1, F) for lane-wise broadcast
    return {
        "w1_t": w1.T,                               # (state_dim, H)
        "b1": row(b1),
        "bn_gamma": jnp.ones((1, hidden_dim), jnp.float32),
        "bn_beta": jnp.zeros((1, hidden_dim), jnp.float32),
        "bn_mean": jnp.zeros((1, hidden_dim), jnp.float32),
        "bn_var": jnp.ones((1, hidden_dim), jnp.float32),
        "w2s_t": w2[:, :hidden_dim].T,              # (H, H)
        "w2a_t": w2[:, hidden_dim:].T,              # (action_dim, H)
        "b2": row(b2),
        "w3_t": w3.T,                               # (H, H)
        "b3": row(b3),
        "w4_t": w4.T,                               # (H, 1)
        "b4": row(b4),
    }


def critic_reference(state, action, p):
    """Pure-JAX f32 reference (un-folded BN) for validation."""
    x = state @ p["w1_t"] + p["b1"]
    x = (x - p["bn_mean"]) * jax.lax.rsqrt(p["bn_var"] + BN_EPS)
    x = x * p["bn_gamma"] + p["bn_beta"]
    x = jnp.maximum(x, 0.0)
    h = x @ p["w2s_t"] + action @ p["w2a_t"] + p["b2"]
    h = jnp.maximum(h, 0.0)
    h = jnp.maximum(h @ p["w3_t"] + p["b3"], 0.0)
    return h @ p["w4_t"] + p["b4"]


if __name__ == "__main__":
    # hidden_dim=256 is the module default and is MXU/lane aligned.
    # B=16 exercises a 2-tile grid (the v7x dual-TC path).
    B, STATE_DIM, ACTION_DIM, HIDDEN_DIM = 16, 16, 8, 256

    key = jax.random.PRNGKey(0)
    k_state, k_action, k_params = jax.random.split(key, 3)

    state = jax.random.normal(k_state, (B, STATE_DIM), jnp.float32)
    action = jax.random.normal(k_action, (B, ACTION_DIM), jnp.float32)
    params = init_critic_params(k_params, STATE_DIM, ACTION_DIM, HIDDEN_DIM)

    q = jax.block_until_ready(critic_forward(state, action, params))

    q_ref = critic_reference(state, action, params)
    assert q.shape == (B, 1), q.shape
    # bf16 matmul operands -> looser tolerance than the pure-f32 version.
    assert jnp.allclose(q, q_ref, atol=5e-3, rtol=5e-2), (q, q_ref)

    print("KERNEL_OK")
</pallas_src>

<mosaic_0001>
module attributes {stable_mosaic.version = 11 : i64} {
  func.func @critic_kernel(%arg0: i32, %arg1: memref<8x16xf32, #tpu.memory_space<vmem>>, %arg2: memref<8x8xf32, #tpu.memory_space<vmem>>, %arg3: memref<16x256xbf16, #tpu.memory_space<vmem>>, %arg4: memref<256x256xbf16, #tpu.memory_space<vmem>>, %arg5: memref<256x256xbf16, #tpu.memory_space<vmem>>, %arg6: memref<8x256xf32, #tpu.memory_space<vmem>>, %arg7: memref<5x256xf32, #tpu.memory_space<vmem>>, %arg8: memref<8x1xf32, #tpu.memory_space<vmem>>) attributes {dimension_semantics = [#tpu.dimension_semantics<parallel>], iteration_bounds = array<i64: 2>, scalar_prefetch = 0 : i64, scratch_operands = 0 : i64, tpu.core_type = #tpu.core_type<tc>, window_params = [{transform_indices = @transform_0, window_bounds = array<i64: 8, 16>}, {transform_indices = @transform_1, window_bounds = array<i64: 8, 8>}, {pipeline_mode = #tpu.pipeline_mode<synchronous>, transform_indices = @transform_2, window_bounds = array<i64: 16, 256>}, {pipeline_mode = #tpu.pipeline_mode<synchronous>, transform_indices = @transform_3, window_bounds = array<i64: 256, 256>}, {pipeline_mode = #tpu.pipeline_mode<synchronous>, transform_indices = @transform_4, window_bounds = array<i64: 256, 256>}, {pipeline_mode = #tpu.pipeline_mode<synchronous>, transform_indices = @transform_5, window_bounds = array<i64: 8, 256>}, {pipeline_mode = #tpu.pipeline_mode<synchronous>, transform_indices = @transform_6, window_bounds = array<i64: 5, 256>}, {transform_indices = @transform_7, window_bounds = array<i64: 8, 1>}]} {
    %c0 = arith.constant 0 : index
    %c0_0 = arith.constant 0 : index
    %0 = vector.load %arg1[%c0, %c0_0] : memref<8x16xf32, #tpu.memory_space<vmem>>, vector<8x16xf32>
    %1 = arith.truncf %0 : vector<8x16xf32> to vector<8x16xbf16>
    %c0_1 = arith.constant 0 : index
    %c0_2 = arith.constant 0 : index
    %2 = vector.load %arg3[%c0_1, %c0_2] : memref<16x256xbf16, #tpu.memory_space<vmem>>, vector<16x256xbf16>
    %cst = arith.constant dense<0.000000e+00> : vector<8x256xf32>
    %3 = tpu.matmul %1, %2, %cst {dimension_numbers = #tpu.dot_dimension_numbers<[1], [0], [0], [1], [0, 0, 1, 1], [], []>} : vector<8x16xbf16>, vector<16x256xbf16>, vector<8x256xf32> -> vector<8x256xf32>
    %c0_3 = arith.constant 0 : index
    %c0_4 = arith.constant 0 : index
    %4 = vector.load %arg7[%c0_3, %c0_4] : memref<5x256xf32, #tpu.memory_space<vmem>>, vector<1x256xf32>
    %5 = vector.broadcast %4 : vector<1x256xf32> to vector<8x256xf32>
    %6 = arith.addf %3, %5 : vector<8x256xf32>
    %cst_5 = arith.constant 0.000000e+00 : f32
    %7 = vector.broadcast %cst_5 : f32 to vector<8x256xf32>
    %8 = arith.maximumf %6, %7 : vector<8x256xf32>
    %9 = arith.truncf %8 : vector<8x256xf32> to vector<8x256xbf16>
    %c0_6 = arith.constant 0 : index
    %c0_7 = arith.constant 0 : index
    %10 = vector.load %arg4[%c0_6, %c0_7] : memref<256x256xbf16, #tpu.memory_space<vmem>>, vector<256x256xbf16>
    %cst_8 = arith.constant dense<0.000000e+00> : vector<8x256xf32>
    %11 = tpu.matmul %9, %10, %cst_8 {dimension_numbers = #tpu.dot_dimension_numbers<[1], [0], [0], [1], [0, 0, 1, 1], [], []>} : vector<8x256xbf16>, vector<256x256xbf16>, vector<8x256xf32> -> vector<8x256xf32>
    %c0_9 = arith.constant 0 : index
    %c0_10 = arith.constant 0 : index
    %12 = vector.load %arg2[%c0_9, %c0_10] : memref<8x8xf32, #tpu.memory_space<vmem>>, vector<8x8xf32>
    %13 = vector.extract_strided_slice %12 {offsets = [0, 0], sizes = [8, 1], strides = [1, 1]} : vector<8x8xf32> to vector<8x1xf32>
    %c0_11 = arith.constant 0 : index
    %c0_12 = arith.constant 0 : index
    %14 = vector.load %arg6[%c0_11, %c0_12] : memref<8x256xf32, #tpu.memory_space<vmem>>, vector<1x256xf32>
    %15 = vector.broadcast %13 : vector<8x1xf32> to vector<8x256xf32>
    %16 = vector.broadcast %14 : vector<1x256xf32> to vector<8x256xf32>
    %17 = arith.mulf %15, %16 : vector<8x256xf32>
    %18 = arith.addf %11, %17 : vector<8x256xf32>
    %19 = vector.extract_strided_slice %12 {offsets = [0, 1], sizes = [8, 1], strides = [1, 1]} : vector<8x8xf32> to vector<8x1xf32>
    %c1 = arith.constant 1 : index
    %c0_13 = arith.constant 0 : index
    %20 = vector.load %arg6[%c1, %c0_13] : memref<8x256xf32, #tpu.memory_space<vmem>>, vector<1x256xf32>
    %21 = vector.broadcast %19 : vector<8x1xf32> to vector<8x256xf32>
    %22 = vector.broadcast %20 : vector<1x256xf32> to vector<8x256xf32>
    %23 = arith.mulf %21, %22 : vector<8x256xf32>
    %24 = arith.addf %18, %23 : vector<8x256xf32>
    %25 = vector.extract_strided_slice %12 {offsets = [0, 2], sizes = [8, 1], strides = [1, 1]} : vector<8x8xf32> to vector<8x1xf32>
    %c2 = arith.constant 2 : index
    %c0_14 = arith.constant 0 : index
    %26 = vector.load %arg6[%c2, %c0_14] : memref<8x256xf32, #tpu.memory_space<vmem>>, vector<1x256xf32>
    %27 = vector.broadcast %25 : vector<8x1xf32> to vector<8x256xf32>
    %28 = vector.broadcast %26 : vector<1x256xf32> to vector<8x256xf32>
    %29 = arith.mulf %27, %28 : vector<8x256xf32>
    %30 = arith.addf %24, %29 : vector<8x256xf32>
    %31 = vector.extract_strided_slice %12 {offsets = [0, 3], sizes = [8, 1], strides = [1, 1]} : vector<8x8xf32> to vector<8x1xf32>
    %c3 = arith.constant 3 : index
    %c0_15 = arith.constant 0 : index
    %32 = vector.load %arg6[%c3, %c0_15] : memref<8x256xf32, #tpu.memory_space<vmem>>, vector<1x256xf32>
    %33 = vector.broadcast %31 : vector<8x1xf32> to vector<8x256xf32>
    %34 = vector.broadcast %32 : vector<1x256xf32> to vector<8x256xf32>
    %35 = arith.mulf %33, %34 : vector<8x256xf32>
    %36 = arith.addf %30, %35 : vector<8x256xf32>
    %37 = vector.extract_strided_slice %12 {offsets = [0, 4], sizes = [8, 1], strides = [1, 1]} : vector<8x8xf32> to vector<8x1xf32>
    %c4 = arith.constant 4 : index
    %c0_16 = arith.constant 0 : index
    %38 = vector.load %arg6[%c4, %c0_16] : memref<8x256xf32, #tpu.memory_space<vmem>>, vector<1x256xf32>
    %39 = vector.broadcast %37 : vector<8x1xf32> to vector<8x256xf32>
    %40 = vector.broadcast %38 : vector<1x256xf32> to vector<8x256xf32>
    %41 = arith.mulf %39, %40 : vector<8x256xf32>
    %42 = arith.addf %36, %41 : vector<8x256xf32>
    %43 = vector.extract_strided_slice %12 {offsets = [0, 5], sizes = [8, 1], strides = [1, 1]} : vector<8x8xf32> to vector<8x1xf32>
    %c5 = arith.constant 5 : index
    %c0_17 = arith.constant 0 : index
    %44 = vector.load %arg6[%c5, %c0_17] : memref<8x256xf32, #tpu.memory_space<vmem>>, vector<1x256xf32>
    %45 = vector.broadcast %43 : vector<8x1xf32> to vector<8x256xf32>
    %46 = vector.broadcast %44 : vector<1x256xf32> to vector<8x256xf32>
    %47 = arith.mulf %45, %46 : vector<8x256xf32>
    %48 = arith.addf %42, %47 : vector<8x256xf32>
    %49 = vector.extract_strided_slice %12 {offsets = [0, 6], sizes = [8, 1], strides = [1, 1]} : vector<8x8xf32> to vector<8x1xf32>
    %c6 = arith.constant 6 : index
    %c0_18 = arith.constant 0 : index
    %50 = vector.load %arg6[%c6, %c0_18] : memref<8x256xf32, #tpu.memory_space<vmem>>, vector<1x256xf32>
    %51 = vector.broadcast %49 : vector<8x1xf32> to vector<8x256xf32>
    %52 = vector.broadcast %50 : vector<1x256xf32> to vector<8x256xf32>
    %53 = arith.mulf %51, %52 : vector<8x256xf32>
    %54 = arith.addf %48, %53 : vector<8x256xf32>
    %55 = vector.extract_strided_slice %12 {offsets = [0, 7], sizes = [8, 1], strides = [1, 1]} : vector<8x8xf32> to vector<8x1xf32>
    %c7 = arith.constant 7 : index
    %c0_19 = arith.constant 0 : index
    %56 = vector.load %arg6[%c7, %c0_19] : memref<8x256xf32, #tpu.memory_space<vmem>>, vector<1x256xf32>
    %57 = vector.broadcast %55 : vector<8x1xf32> to vector<8x256xf32>
    %58 = vector.broadcast %56 : vector<1x256xf32> to vector<8x256xf32>
    %59 = arith.mulf %57, %58 : vector<8x256xf32>
    %60 = arith.addf %54, %59 : vector<8x256xf32>
    %c1_20 = arith.constant 1 : index
    %c0_21 = arith.constant 0 : index
    %61 = vector.load %arg7[%c1_20, %c0_21] : memref<5x256xf32, #tpu.memory_space<vmem>>, vector<1x256xf32>
    %62 = vector.broadcast %61 : vector<1x256xf32> to vector<8x256xf32>
    %63 = arith.addf %60, %62 : vector<8x256xf32>
    %cst_22 = arith.constant 0.000000e+00 : f32
    %64 = vector.broadcast %cst_22 : f32 to vector<8x256xf32>
    %65 = arith.maximumf %63, %64 : vector<8x256xf32>
    %66 = arith.truncf %65 : vector<8x256xf32> to vector<8x256xbf16>
    %c0_23 = arith.constant 0 : index
    %c0_24 = arith.constant 0 : index
    %67 = vector.load %arg5[%c0_23, %c0_24] : memref<256x256xbf16, #tpu.memory_space<vmem>>, vector<256x256xbf16>
    %cst_25 = arith.constant dense<0.000000e+00> : vector<8x256xf32>
    %68 = tpu.matmul %66, %67, %cst_25 {dimension_numbers = #tpu.dot_dimension_numbers<[1], [0], [0], [1], [0, 0, 1, 1], [], []>} : vector<8x256xbf16>, vector<256x256xbf16>, vector<8x256xf32> -> vector<8x256xf32>
    %c2_26 = arith.constant 2 : index
    %c0_27 = arith.constant 0 : index
    %69 = vector.load %arg7[%c2_26, %c0_27] : memref<5x256xf32, #tpu.memory_space<vmem>>, vector<1x256xf32>
    %70 = vector.broadcast %69 : vector<1x256xf32> to vector<8x256xf32>
    %71 = arith.addf %68, %70 : vector<8x256xf32>
    %cst_28 = arith.constant 0.000000e+00 : f32
    %72 = vector.broadcast %cst_28 : f32 to vector<8x256xf32>
    %73 = arith.maximumf %71, %72 : vector<8x256xf32>
    %c3_29 = arith.constant 3 : index
    %c0_30 = arith.constant 0 : index
    %74 = vector.load %arg7[%c3_29, %c0_30] : memref<5x256xf32, #tpu.memory_space<vmem>>, vector<1x256xf32>
    %75 = vector.broadcast %74 : vector<1x256xf32> to vector<8x256xf32>
    %76 = arith.mulf %73, %75 : vector<8x256xf32>
    %cst_31 = arith.constant dense<0.000000e+00> : vector<8xf32>
    %77 = vector.multi_reduction <add>, %76, %cst_31 [1] : vector<8x256xf32> to vector<8xf32>
    %78 = vector.shape_cast %77 : vector<8xf32> to vector<8x1xf32>
    %c4_32 = arith.constant 4 : index
    %c0_33 = arith.constant 0 : index
    %79 = vector.load %arg7[%c4_32, %c0_33] : memref<5x256xf32, #tpu.memory_space<vmem>>, vector<1x1xf32>
    %80 = vector.broadcast %79 : vector<1x1xf32> to vector<8x1xf32>
    %81 = arith.addf %78, %80 : vector<8x1xf32>
    %c0_34 = arith.constant 0 : index
    %c0_35 = arith.constant 0 : index
    %82 = vector.load %arg8[%c0_34, %c0_35] : memref<8x1xf32, #tpu.memory_space<vmem>>, vector<8x1xf32>
    tpu.vector_store %arg8[%c0_34, %c0_35], %81 {strides = array<i32>} : memref<8x1xf32, #tpu.memory_space<vmem>>, vector<8x1xf32>,
    return
  }
  func.func @transform_0(%arg0: i32) -> (i32, i32) {
    %c0_i32 = arith.constant 0 : i32
    %c0_i32_0 = arith.constant 0 : i32
    return %arg0, %c0_i32 : i32, i32
  }
  func.func @transform_1(%arg0: i32) -> (i32, i32) {
    %c0_i32 = arith.constant 0 : i32
    %c0_i32_0 = arith.constant 0 : i32
    return %arg0, %c0_i32 : i32, i32
  }
  func.func @transform_2(%arg0: i32) -> (i32, i32) {
    %c0_i32 = arith.constant 0 : i32
    %c0_i32_0 = arith.constant 0 : i32
    %c0_i32_1 = arith.constant 0 : i32
    return %c0_i32, %c0_i32_0 : i32, i32
  }
  func.func @transform_3(%arg0: i32) -> (i32, i32) {
    %c0_i32 = arith.constant 0 : i32
    %c0_i32_0 = arith.constant 0 : i32
    %c0_i32_1 = arith.constant 0 : i32
    return %c0_i32, %c0_i32_0 : i32, i32
  }
  func.func @transform_4(%arg0: i32) -> (i32, i32) {
    %c0_i32 = arith.constant 0 : i32
    %c0_i32_0 = arith.constant 0 : i32
    %c0_i32_1 = arith.constant 0 : i32
    return %c0_i32, %c0_i32_0 : i32, i32
  }
  func.func @transform_5(%arg0: i32) -> (i32, i32) {
    %c0_i32 = arith.constant 0 : i32
    %c0_i32_0 = arith.constant 0 : i32
    %c0_i32_1 = arith.constant 0 : i32
    return %c0_i32, %c0_i32_0 : i32, i32
  }
  func.func @transform_6(%arg0: i32) -> (i32, i32) {
    %c0_i32 = arith.constant 0 : i32
    %c0_i32_0 = arith.constant 0 : i32
    %c0_i32_1 = arith.constant 0 : i32
    return %c0_i32, %c0_i32_0 : i32, i32
  }
  func.func @transform_7(%arg0: i32) -> (i32, i32) {
    %c0_i32 = arith.constant 0 : i32
    %c0_i32_0 = arith.constant 0 : i32
    return %arg0, %c0_i32 : i32, i32
  }
}

</mosaic_0001>

<llo_original>
// kernel: critic_forward.1
$region0: #{critic_forward.1}
  #allocation0 [shape = 'u32[]', space=smem, size = 0x4, offset = 0x4, fixed_abs, tag = 'smem constant byte address 0x4 - core index']
  #allocation1 [shape = 'u32[144,128]{1,0:T(1,128)}', space=vmem, size = 0x12000, scoped, tag = 'internal scratch']
  %s0 = inlined_call_operand.vmem [shape: f32[16,16], index: 0, kind: input, shape index: {}]
  %s1 = inlined_call_operand.vmem [shape: f32[16,8], index: 1, kind: input, shape index: {}]
  %s2 = inlined_call_operand.vmem [shape: bf16[16,256], index: 2, kind: input, shape index: {}]
  %s3 = inlined_call_operand.vmem [shape: bf16[256,256], index: 3, kind: input, shape index: {}]
  %s4 = inlined_call_operand.vmem [shape: bf16[256,256], index: 4, kind: input, shape index: {}]
  %s5 = inlined_call_operand.vmem [shape: f32[8,256], index: 5, kind: input, shape index: {}]
  %s6 = inlined_call_operand.vmem [shape: f32[5,256], index: 6, kind: input, shape index: {}]
  %s7 = inlined_call_operand.vmem [shape: f32[16,1], index: 7, kind: output, shape index: {}]
  %s8 = sld [smem:[#allocation0]]
  $region61: #{critic_forward.1} parent=0
    _
  %s10 = ssub.s32 1, %s8
  %s11 = scalar_select 0, %s10, %s8
  loop: start=0, step=1, limit=4
  $region2: #{critic_forward.1} parent=0 // loop_pre_header
    _
  $region3: #{critic_forward.1} parent=0 // loop_header
    %s13 = sphi 0, %s17
    %p14 = scmp.ge.s32.totalorder %s13, 4
    %s23 = sphi 0, %s25
    %s26 = sphi 0, %s23
    %s27 = sphi 0, %s26
    %s43 = sphi 0, %s27
    %s49 = sphi 0, %s51
    %s52 = sphi 0, %s49
    %s53 = sphi 0, %s52
    %s69 = sphi 0, %s53
    %s73 = sphi 0, %s73
    %s75 = sphi 0, %s73
    %s76 = sphi 0, %s75
    %s90 = sphi 0, %s76
    %s94 = sphi 0, %s94
    %s96 = sphi 0, %s94
    %s97 = sphi 0, %s96
    %s111 = sphi 0, %s97
    %s115 = sphi 0, %s115
    %s117 = sphi 0, %s115
    %s118 = sphi 0, %s117
    %s132 = sphi 0, %s118
    %s136 = sphi 0, %s136
    %s138 = sphi 0, %s136
    %s139 = sphi 0, %s138
    %s153 = sphi 0, %s139
    %s157 = sphi 0, %s157
    %s159 = sphi 0, %s157
    %s160 = sphi 0, %s159
    %s174 = sphi 0, %s160
    %s180 = sphi 0, %s182
    %s183 = sphi 0, %s180
    %s184 = sphi 0, %s183
    %s200 = sphi 0, %s184
  $region4: #{critic_forward.1} parent=0 // loop_header_branch
    %16 = sbr.rel (%p14) target = $region8
  $region5: #{critic_forward.1} parent=0 // loop_body
    %s18 = ssub.s32 %s13, 1
    %s19 = ssub.s32 %s13, 2
    %s20 = sadd.s32 %s13, 1
    %s21 = ssub.s32 %s13, %s20
    %p22 = scmp.eq.s32.totalorder %s21, 0
    %s24 = sadd.s32 %s23, 1
    %s25 = scalar_select %p22, %s23, %s24
    %p28 = pneg %p22
    %p29 = scmp.eq.s32.totalorder %s13, 1
    %p30 = por %p28, %p29
    %p31 = scmp.ne.s32.totalorder %s23, %s26
    %p32 = scmp.eq.s32.totalorder %s13, 0
    %p33 = por %p31, %p32
    %p34 = scmp.ne.s32.totalorder %s23, %s26
    %p35 = scmp.eq.s32.totalorder %s18, 1
    %p36 = por %p34, %p35
    %p37 = scmp.ne.s32.totalorder %s26, %s27
    %p38 = scmp.eq.s32.totalorder %s18, 0
    %p39 = por %p37, %p38
    %p40 = scmp.ne.s32.totalorder %s26, %s27
    %p41 = scmp.eq.s32.totalorder %s19, 1
    %p42 = por %p40, %p41
    %p44 = scmp.ne.s32.totalorder %s27, %s43
    %p45 = scmp.eq.s32.totalorder %s19, 0
    %p46 = por %p44, %p45
    %s47 = ssub.s32 %s13, %s20
    %p48 = scmp.eq.s32.totalorder %s47, 0
    %s50 = sadd.s32 %s49, 1
    %s51 = scalar_select %p48, %s49, %s50
    %p54 = pneg %p48
    %p55 = scmp.eq.s32.totalorder %s13, 1
    %p56 = por %p54, %p55
    %p57 = scmp.ne.s32.totalorder %s49, %s52
    %p58 = scmp.eq.s32.totalorder %s13, 0
    %p59 = por %p57, %p58
    %p60 = scmp.ne.s32.totalorder %s49, %s52
    %p61 = scmp.eq.s32.totalorder %s18, 1
    %p62 = por %p60, %p61
    %p63 = scmp.ne.s32.totalorder %s52, %s53
    %p64 = scmp.eq.s32.totalorder %s18, 0
    %p65 = por %p63, %p64
    %p66 = scmp.ne.s32.totalorder %s52, %s53
    %p67 = scmp.eq.s32.totalorder %s19, 1
    %p68 = por %p66, %p67
    %p70 = scmp.ne.s32.totalorder %s53, %s69
    %p71 = scmp.eq.s32.totalorder %s19, 0
    %p72 = por %p70, %p71
    %s74 = sadd.s32 %s73, 1
    %p77 = scmp.eq.s32.totalorder %s13, 1
    %p78 = scmp.ne.s32.totalorder %s73, %s75
    %p79 = scmp.eq.s32.totalorder %s13, 0
    %p80 = por %p78, %p79
    %p81 = scmp.ne.s32.totalorder %s73, %s75
    %p82 = scmp.eq.s32.totalorder %s18, 1
    %p83 = por %p81, %p82
    %p84 = scmp.ne.s32.totalorder %s75, %s76
    %p85 = scmp.eq.s32.totalorder %s18, 0
    %p86 = por %p84, %p85
    %p87 = scmp.ne.s32.totalorder %s75, %s76
    %p88 = scmp.eq.s32.totalorder %s19, 1
    %p89 = por %p87, %p88
    %p91 = scmp.ne.s32.totalorder %s76, %s90
    %p92 = scmp.eq.s32.totalorder %s19, 0
    %p93 = por %p91, %p92
    %s95 = sadd.s32 %s94, 1
    %p98 = scmp.eq.s32.totalorder %s13, 1
    %p99 = scmp.ne.s32.totalorder %s94, %s96
    %p100 = scmp.eq.s32.totalorder %s13, 0
    %p101 = por %p99, %p100
    %p102 = scmp.ne.s32.totalorder %s94, %s96
    %p103 = scmp.eq.s32.totalorder %s18, 1
    %p104 = por %p102, %p103
    %p105 = scmp.ne.s32.totalorder %s96, %s97
    %p106 = scmp.eq.s32.totalorder %s18, 0
    %p107 = por %p105, %p106
    %p108 = scmp.ne.s32.totalorder %s96, %s97
    %p109 = scmp.eq.s32.totalorder %s19, 1
    %p110 = por %p108, %p109
    %p112 = scmp.ne.s32.totalorder %s97, %s111
    %p113 = scmp.eq.s32.totalorder %s19, 0
    %p114 = por %p112, %p113
    %s116 = sadd.s32 %s115, 1
    %p119 = scmp.eq.s32.totalorder %s13, 1
    %p120 = scmp.ne.s32.totalorder %s115, %s117
    %p121 = scmp.eq.s32.totalorder %s13, 0
    %p122 = por %p120, %p121
    %p123 = scmp.ne.s32.totalorder %s115, %s117
    %p124 = scmp.eq.s32.totalorder %s18, 1
    %p125 = por %p123, %p124
    %p126 = scmp.ne.s32.totalorder %s117, %s118
    %p127 = scmp.eq.s32.totalorder %s18, 0
    %p128 = por %p126, %p127
    %p129 = scmp.ne.s32.totalorder %s117, %s118
    %p130 = scmp.eq.s32.totalorder %s19, 1
    %p131 = por %p129, %p130
    %p133 = scmp.ne.s32.totalorder %s118, %s132
    %p134 = scmp.eq.s32.totalorder %s19, 0
    %p135 = por %p133, %p134
    %s137 = sadd.s32 %s136, 1
    %p140 = scmp.eq.s32.totalorder %s13, 1
    %p141 = scmp.ne.s32.totalorder %s136, %s138
    %p142 = scmp.eq.s32.totalorder %s13, 0
    %p143 = por %p141, %p142
    %p144 = scmp.ne.s32.totalorder %s136, %s138
    %p145 = scmp.eq.s32.totalorder %s18, 1
    %p146 = por %p144, %p145
    %p147 = scmp.ne.s32.totalorder %s138, %s139
    %p148 = scmp.eq.s32.totalorder %s18, 0
    %p149 = por %p147, %p148
    %p150 = scmp.ne.s32.totalorder %s138, %s139
    %p151 = scmp.eq.s32.totalorder %s19, 1
    %p152 = por %p150, %p151
    %p154 = scmp.ne.s32.totalorder %s139, %s153
    %p155 = scmp.eq.s32.totalorder %s19, 0
    %p156 = por %p154, %p155
    %s158 = sadd.s32 %s157, 1
    %p161 = scmp.eq.s32.totalorder %s13, 1
    %p162 = scmp.ne.s32.totalorder %s157, %s159
    %p163 = scmp.eq.s32.totalorder %s13, 0
    %p164 = por %p162, %p163
    %p165 = scmp.ne.s32.totalorder %s157, %s159
    %p166 = scmp.eq.s32.totalorder %s18, 1
    %p167 = por %p165, %p166
    %p168 = scmp.ne.s32.totalorder %s159, %s160
    %p169 = scmp.eq.s32.totalorder %s18, 0
    %p170 = por %p168, %p169
    %p171 = scmp.ne.s32.totalorder %s159, %s160
    %p172 = scmp.eq.s32.totalorder %s19, 1
    %p173 = por %p171, %p172
    %p175 = scmp.ne.s32.totalorder %s160, %s174
    %p176 = scmp.eq.s32.totalorder %s19, 0
    %p177 = por %p175, %p176
    %s178 = ssub.s32 %s13, %s20
    %p179 = scmp.eq.s32.totalorder %s178, 0
    %s181 = sadd.s32 %s180, 1
    %s182 = scalar_select %p179, %s180, %s181
    %p185 = pneg %p179
    %p186 = scmp.eq.s32.totalorder %s13, 1
    %p187 = por %p185, %p186
    %p188 = scmp.ne.s32.totalorder %s180, %s183
    %p189 = scmp.eq.s32.totalorder %s13, 0
    %p190 = por %p188, %p189
    %p191 = scmp.ne.s32.totalorder %s180, %s183
    %p192 = scmp.eq.s32.totalorder %s18, 1
    %p193 = por %p191, %p192
    %p194 = scmp.ne.s32.totalorder %s183, %s184
    %p195 = scmp.eq.s32.totalorder %s18, 0
    %p196 = por %p194, %p195
    %p197 = scmp.ne.s32.totalorder %s183, %s184
    %p198 = scmp.eq.s32.totalorder %s19, 1
    %p199 = por %p197, %p198
    %p201 = scmp.ne.s32.totalorder %s184, %s200
    %p202 = scmp.eq.s32.totalorder %s19, 0
    %p203 = por %p201, %p202
    %p204 = scmp.le.s32.totalorder 1, %s13
    %p205 = scmp.lt.s32.totalorder %s13, 3
    %p206 = pnand %p204, %p205
    %p207 = pneg %p206
    // Predicated region
    $region9: #{critic_forward.1} parent=5 // pred_check
      _
    $region10: #{critic_forward.1} parent=5 // pred_check_branch
      %209 = sbr.rel (%p206) target = $region12
    $region11: #{critic_forward.1} parent=5 // pred_region
      %s210 = ssub.s32 %s13, 1
      // Predicated region
      $region13: #{critic_forward.1} parent=11 // pred_check
        %p211 = pneg %p86
      $region14: #{critic_forward.1} parent=11 // pred_check_branch
        %213 = sbr.rel (%p211) target = $region16
      $region15: #{critic_forward.1} parent=11 // pred_region
        _
      $region16: #{critic_forward.1} parent=11 // pred_fallthru
        _
      // Predicated region
      $region17: #{critic_forward.1} parent=11 // pred_check
        %p214 = pneg %p107
      $region18: #{critic_forward.1} parent=11 // pred_check_branch
        %216 = sbr.rel (%p214) target = $region20
      $region19: #{critic_forward.1} parent=11 // pred_region
        _
      $region20: #{critic_forward.1} parent=11 // pred_fallthru
        _
      // Predicated region
      $region21: #{critic_forward.1} parent=11 // pred_check
        %p217 = pneg %p128
      $region22: #{critic_forward.1} parent=11 // pred_check_branch
        %219 = sbr.rel (%p217) target = $region24
      $region23: #{critic_forward.1} parent=11 // pred_region
        _
      $region24: #{critic_forward.1} parent=11 // pred_fallthru
        _
      // Predicated region
      $region25: #{critic_forward.1} parent=11 // pred_check
        %p220 = pneg %p149
      $region26: #{critic_forward.1} parent=11 // pred_check_branch
        %222 = sbr.rel (%p220) target = $region28
      $region27: #{critic_forward.1} parent=11 // pred_region
        _
      $region28: #{critic_forward.1} parent=11 // pred_fallthru
        _
      // Predicated region
      $region29: #{critic_forward.1} parent=11 // pred_check
        %p223 = pneg %p170
      $region30: #{critic_forward.1} parent=11 // pred_check_branch
        %225 = sbr.rel (%p223) target = $region32
      $region31: #{critic_forward.1} parent=11 // pred_region
        _
      $region32: #{critic_forward.1} parent=11 // pred_fallthru
        _
    $region12: #{critic_forward.1} parent=5 // pred_fallthru
      _
    %p226 = scmp.lt.s32.totalorder %s13, 2
    // Predicated region
    $region33: #{critic_forward.1} parent=5 // pred_check
      %p227 = pneg %p226
    $region34: #{critic_forward.1} parent=5 // pred_check_branch
      %229 = sbr.rel (%p227) target = $region36
    $region35: #{critic_forward.1} parent=5 // pred_region
      // Predicated region
      $region37: #{critic_forward.1} parent=35 // pred_check
        %p230 = pneg %p33
      $region38: #{critic_forward.1} parent=35 // pred_check_branch
        %232 = sbr.rel (%p230) target = $region40
      $region39: #{critic_forward.1} parent=35 // pred_region
        %p233 = scmp.lt.s32.totalorder %s13, 1
        %s234 = scalar_select %p233, %s13, 1
        %s235 = smul.addr %s234, 8
        %s236 = scalar_lea.vmem %s0, %s235
      $region40: #{critic_forward.1} parent=35 // pred_fallthru
        _
      // Predicated region
      $region41: #{critic_forward.1} parent=35 // pred_check
        %p237 = pneg %p59
      $region42: #{critic_forward.1} parent=35 // pred_check_branch
        %239 = sbr.rel (%p237) target = $region44
      $region43: #{critic_forward.1} parent=35 // pred_region
        %p240 = scmp.lt.s32.totalorder %s13, 1
        %s241 = scalar_select %p240, %s13, 1
        %s242 = smul.addr %s241, 8
        %s243 = scalar_lea.vmem %s1, %s242
      $region44: #{critic_forward.1} parent=35 // pred_fallthru
        _
    $region36: #{critic_forward.1} parent=5 // pred_fallthru
      _
    %p244 = scmp.le.s32.totalorder 1, %s13
    %p245 = scmp.lt.s32.totalorder %s13, 3
    %p246 = pnand %p244, %p245
    %p247 = pneg %p246
    // Predicated region
    $region45: #{critic_forward.1} parent=5 // pred_check
      _
    $region46: #{critic_forward.1} parent=5 // pred_check_branch
      %249 = sbr.rel (%p246) target = $region48
    $region47: #{critic_forward.1} parent=5 // pred_region
      %s250 = ssub.s32 %s13, 1
      %p251 = scmp.lt.s32.totalorder %s18, 1
      %s252 = scalar_select %p251, %s18, 1
      %s253 = smul.addr %s252, 8
      %s254 = scalar_lea.vmem %s0, %s253
      %p255 = pneg %p39
      %p256 = pneg %p36
      %p257 = scmp.lt.s32.totalorder %s18, 1
      %s258 = scalar_select %p257, %s18, 1
      %s259 = smul.addr %s258, 8
      %s260 = scalar_lea.vmem %s1, %s259
      %p261 = pneg %p65
      %p262 = pneg %p62
      %p263 = pneg %p86
      %p264 = pneg %p83
      %p265 = pneg %p107
      %p266 = pneg %p104
      %p267 = pneg %p128
      %p268 = pneg %p125
      %p269 = pneg %p149
      %p270 = pneg %p146
      %p271 = pneg %p170
      %p272 = pneg %p167
      %p273 = pneg %p196
      %p274 = pneg %p193
      %p275 = scmp.lt.s32.totalorder %s18, 1
      %s276 = scalar_select %p275, %s18, 1
      %s277 = smul.addr %s276, 8
      %s278 = scalar_lea.vmem %s7, %s277
      %p279 = scmp.lt.s32.totalorder %s18, 1
      %s280 = scalar_select %p279, %s18, 1
      %s281 = smul.addr %s280, 8
      %s282 = scalar_lea.vmem %s0, %s281
      %p283 = scmp.lt.s32.totalorder %s18, 1
      %s284 = scalar_select %p283, %s18, 1
      %s285 = smul.addr %s284, 8
      %s286 = scalar_lea.vmem %s1, %s285
      %p287 = scmp.lt.s32.totalorder %s18, 1
      %s288 = scalar_select %p287, %s18, 1
      %s289 = smul.addr %s288, 8
      %s290 = scalar_lea.vmem %s7, %s289
      %v292 = vld [vmem:[%s282] sm:$0xff]
      %v293 = vpack.c.bf16 %v292, %v292
      %v294 = vld [vmem:[%s2] sm:$0xff]
      %v295 = vld [vmem:[%s2 + $0x8] sm:$0xff]
      %v296 = vld [vmem:[%s6] ss:$8 sm:$0x3]
      %v298 = vlaneseq
      %v299 = vshrl.u32 %v298, 7
      %v300 = vsub.s32 0, %v299
      %v301 = vrot.slane %v296, %v300
      %v302 = vlaneseq
      %v303 = vshrl.u32 %v302, 7
      %v304 = vsub.s32 1, %v303
      %v305 = vrot.slane %v296, %v304
      %v310 = vunpack.c.l.b16 %v294
      %v311 = vunpack.c.h.b16 %v294
      %v312 = vunpack.c.l.b16 %v295
      %v313 = vunpack.c.h.b16 %v295
      %v314 = vpack.c.b16 %v312, %v310
      %v315 = vpack.c.b16 %v313, %v311
      %vm318 = vcmask 130048
      %v320 = vsel %vm318, %v293, 0
      %322 = vmatprep.subr.bf16.mxu0 %v315
      %323 = vmatpush1.bf16.msra.mxu0 %v314
      %324 = vmatprep.subr.bf16.mxu0 0
      %325 = vmatpush1.bf16.msra.mxu0 0
      %326 = vmatprep.subr.bf16.mxu0 0
      %327 = vmatpush1.bf16.msra.mxu0 0
      %328 = vmatprep.subr.bf16.mxu0 0
      %329 = vmatpush1.bf16.msra.mxu0 0
      %330 = vmatprep.subr.bf16.mxu0 0
      %331 = vmatpush1.bf16.msra.mxu0 0
      %332 = vmatprep.subr.bf16.mxu0 0
      %333 = vmatpush1.bf16.msra.mxu0 0
      %334 = vmatprep.subr.bf16.mxu0 0
      %335 = vmatpush1.bf16.msra.mxu0 0
      %336 = vmatprep.subr.bf16.mxu0 0
      %337 = vmatpush1.bf16.msra.mxu0 0
      %338 = vmatprep.subr.bf16.mxu0 0
      %339 = vmatpush1.bf16.msra.mxu0 0
      %340 = vmatprep.subr.bf16.mxu0 0
      %341 = vmatpush1.bf16.msra.mxu0 0
      %342 = vmatprep.subr.bf16.mxu0 0
      %343 = vmatpush1.bf16.msra.mxu0 0
      %344 = vmatprep.subr.bf16.mxu0 0
      %345 = vmatpush1.bf16.msra.mxu0 0
      %346 = vmatprep.subr.bf16.mxu0 0
      %347 = vmatpush1.bf16.msra.mxu0 0
      %348 = vmatprep.subr.bf16.mxu0 0
      %349 = vmatpush1.bf16.msra.mxu0 0
      %350 = vmatprep.subr.bf16.mxu0 0
      %351 = vmatpush1.bf16.msra.mxu0 0
      %352 = vmatprep.subr.bf16.mxu0 0
      %353 = vmatpush1.bf16.msra.mxu0 0
      %354 = vmatprep.mubr.bf16.mxu0 0
      %355 = vmatmul.mubr.bf16.gmra.mrb[0].mxu0 %v320
      %v356 = vpop.f32.mrb[0].mxu0
      %v357 = vadd.f32 %v301, %v356
      %v358 = vpop.f32.mrb[0].mxu0
      %v359 = vadd.f32 %v305, %v358
      %v360 = vpop.f32.mrb[0].mxu0
      %v361 = vpop.f32.mrb[0].mxu0
      %362 = vdwg.mxu0
      %v363 = vmax.f32 %v357, 0.0
      %v364 = vmax.f32 %v359, 0.0
      %v365 = vpack.c.bf16 %v363, %v363
      %v366 = vpack.c.bf16 %v364, %v364
      %v367 = vld [vmem:[%s3] sm:$0xff]
      %v368 = vld [vmem:[%s3 + $0x8] sm:$0xff]
      %v369 = vld [vmem:[%s3 + $0x10] sm:$0xff]
      %v370 = vld [vmem:[%s3 + $0x18] sm:$0xff]
      %v371 = vld [vmem:[%s3 + $0x20] sm:$0xff]
      %v372 = vld [vmem:[%s3 + $0x28] sm:$0xff]
      %v373 = vld [vmem:[%s3 + $0x30] sm:$0xff]
      %v374 = vld [vmem:[%s3 + $0x38] sm:$0xff]
      %v375 = vld [vmem:[%s3 + $0x40] sm:$0xff]
      %v376 = vld [vmem:[%s3 + $0x48] sm:$0xff]
      %v377 = vld [vmem:[%s3 + $0x50] sm:$0xff]
      %v378 = vld [vmem:[%s3 + $0x58] sm:$0xff]
      %v379 = vld [vmem:[%s3 + $0x60] sm:$0xff]
      %v380 = vld [vmem:[%s3 + $0x68] sm:$0xff]
      %v381 = vld [vmem:[%s3 + $0x70] sm:$0xff]
      %v382 = vld [vmem:[%s3 + $0x78] sm:$0xff]
      %v383 = vld [vmem:[%s3 + $0x80] sm:$0xff]
      %v384 = vld [vmem:[%s3 + $0x88] sm:$0xff]
      %v385 = vld [vmem:[%s3 + $0x90] sm:$0xff]
      %v386 = vld [vmem:[%s3 + $0x98] sm:$0xff]
      %v387 = vld [vmem:[%s3 + $0xa0] sm:$0xff]
      %v388 = vld [vmem:[%s3 + $0xa8] sm:$0xff]
      %v389 = vld [vmem:[%s3 + $0xb0] sm:$0xff]
      %v390 = vld [vmem:[%s3 + $0xb8] sm:$0xff]
      %v391 = vld [vmem:[%s3 + $0xc0] sm:$0xff]
      %v392 = vld [vmem:[%s3 + $0xc8] sm:$0xff]
      %v393 = vld [vmem:[%s3 + $0xd0] sm:$0xff]
      %v394 = vld [vmem:[%s3 + $0xd8] sm:$0xff]
      %v395 = vld [vmem:[%s3 + $0xe0] sm:$0xff]
      %v396 = vld [vmem:[%s3 + $0xe8] sm:$0xff]
      %v397 = vld [vmem:[%s3 + $0xf0] sm:$0xff]
      %v398 = vld [vmem:[%s3 + $0xf8] sm:$0xff]
      %v399 = vld [vmem:[%s286] sm:$0xff]
      %v400 = vld [vmem:[%s5] ss:$8 sm:$0x3]
      %402 = vset.pattern.permute.xlu0 0
      %403 = vperm.xlu0 %402, %v399
      %v404 = vpop.permute.xlu0 %403
      %v407 = vlaneseq
      %v408 = vshrl.u32 %v407, 7
      %v409 = vsub.s32 0, %v408
      %v410 = vrot.slane %v400, %v409
      %v411 = vlaneseq
      %v412 = vshrl.u32 %v411, 7
      %v413 = vsub.s32 1, %v412
      %v414 = vrot.slane %v400, %v413
      %v417 = vmul.f32 %v404, %v410
      %v418 = vmul.f32 %v404, %v414
      %v451 = vunpack.c.l.b16 %v367
      %v452 = vunpack.c.h.b16 %v367
      %v453 = vunpack.c.l.b16 %v368
      %v454 = vunpack.c.h.b16 %v368
      %v455 = vunpack.c.l.b16 %v369
      %v456 = vunpack.c.h.b16 %v369
      %v457 = vunpack.c.l.b16 %v370
      %v458 = vunpack.c.h.b16 %v370
      %v459 = vunpack.c.l.b16 %v371
      %v460 = vunpack.c.h.b16 %v371
      %v461 = vunpack.c.l.b16 %v372
      %v462 = vunpack.c.h.b16 %v372
      %v463 = vunpack.c.l.b16 %v373
      %v464 = vunpack.c.h.b16 %v373
      %v465 = vunpack.c.l.b16 %v374
      %v466 = vunpack.c.h.b16 %v374
      %v467 = vunpack.c.l.b16 %v375
      %v468 = vunpack.c.h.b16 %v375
      %v469 = vunpack.c.l.b16 %v376
      %v470 = vunpack.c.h.b16 %v376
      %v471 = vunpack.c.l.b16 %v377
      %v472 = vunpack.c.h.b16 %v377
      %v473 = vunpack.c.l.b16 %v378
      %v474 = vunpack.c.h.b16 %v378
      %v475 = vunpack.c.l.b16 %v379
      %v476 = vunpack.c.h.b16 %v379
      %v477 = vunpack.c.l.b16 %v380
      %v478 = vunpack.c.h.b16 %v380
      %v479 = vunpack.c.l.b16 %v381
      %v480 = vunpack.c.h.b16 %v381
      %v481 = vunpack.c.l.b16 %v382
      %v482 = vunpack.c.h.b16 %v382
      %v483 = vunpack.c.l.b16 %v383
      %v484 = vunpack.c.h.b16 %v383
      %v485 = vunpack.c.l.b16 %v384
      %v486 = vunpack.c.h.b16 %v384
      %v487 = vunpack.c.l.b16 %v385
      %v488 = vunpack.c.h.b16 %v385
      %v489 = vunpack.c.l.b16 %v386
      %v490 = vunpack.c.h.b16 %v386
      %v491 = vunpack.c.l.b16 %v387
      %v492 = vunpack.c.h.b16 %v387
      %v493 = vunpack.c.l.b16 %v388
      %v494 = vunpack.c.h.b16 %v388
      %v495 = vunpack.c.l.b16 %v389
      %v496 = vunpack.c.h.b16 %v389
      %v497 = vunpack.c.l.b16 %v390
      %v498 = vunpack.c.h.b16 %v390
      %v499 = vunpack.c.l.b16 %v391
      %v500 = vunpack.c.h.b16 %v391
      %v501 = vunpack.c.l.b16 %v392
      %v502 = vunpack.c.h.b16 %v392
      %v503 = vunpack.c.l.b16 %v393
      %v504 = vunpack.c.h.b16 %v393
      %v505 = vunpack.c.l.b16 %v394
      %v506 = vunpack.c.h.b16 %v394
      %v507 = vunpack.c.l.b16 %v395
      %v508 = vunpack.c.h.b16 %v395
      %v509 = vunpack.c.l.b16 %v396
      %v510 = vunpack.c.h.b16 %v396
      %v511 = vunpack.c.l.b16 %v397
      %v512 = vunpack.c.h.b16 %v397
      %v513 = vunpack.c.l.b16 %v398
      %v514 = vunpack.c.h.b16 %v398
      %v515 = vpack.c.b16 %v453, %v451
      %v516 = vpack.c.b16 %v454, %v452
      %v517 = vpack.c.b16 %v457, %v455
      %v518 = vpack.c.b16 %v458, %v456
      %v519 = vpack.c.b16 %v461, %v459
      %v520 = vpack.c.b16 %v462, %v460
      %v521 = vpack.c.b16 %v465, %v463
      %v522 = vpack.c.b16 %v466, %v464
      %v523 = vpack.c.b16 %v469, %v467
      %v524 = vpack.c.b16 %v470, %v468
      %v525 = vpack.c.b16 %v473, %v471
      %v526 = vpack.c.b16 %v474, %v472
      %v527 = vpack.c.b16 %v477, %v475
      %v528 = vpack.c.b16 %v478, %v476
      %v529 = vpack.c.b16 %v481, %v479
      %v530 = vpack.c.b16 %v482, %v480
      %v531 = vpack.c.b16 %v485, %v483
      %v532 = vpack.c.b16 %v486, %v484
      %v533 = vpack.c.b16 %v489, %v487
      %v534 = vpack.c.b16 %v490, %v488
      %v535 = vpack.c.b16 %v493, %v491
      %v536 = vpack.c.b16 %v494, %v492
      %v537 = vpack.c.b16 %v497, %v495
      %v538 = vpack.c.b16 %v498, %v496
      %v539 = vpack.c.b16 %v501, %v499
      %v540 = vpack.c.b16 %v502, %v500
      %v541 = vpack.c.b16 %v505, %v503
      %v542 = vpack.c.b16 %v506, %v504
      %v543 = vpack.c.b16 %v509, %v507
      %v544 = vpack.c.b16 %v510, %v508
      %v545 = vpack.c.b16 %v513, %v511
      %v546 = vpack.c.b16 %v514, %v512
      %579 = vmatprep.subr.bf16.mxu0 %v516
      %580 = vmatpush1.bf16.msra.mxu0 %v515
      %581 = vmatprep.subr.bf16.mxu0 %v518
      %582 = vmatpush1.bf16.msra.mxu0 %v517
      %583 = vmatprep.subr.bf16.mxu0 %v520
      %584 = vmatpush1.bf16.msra.mxu0 %v519
      %585 = vmatprep.subr.bf16.mxu0 %v522
      %586 = vmatpush1.bf16.msra.mxu0 %v521
      %587 = vmatprep.subr.bf16.mxu0 %v524
      %588 = vmatpush1.bf16.msra.mxu0 %v523
      %589 = vmatprep.subr.bf16.mxu0 %v526
      %590 = vmatpush1.bf16.msra.mxu0 %v525
      %591 = vmatprep.subr.bf16.mxu0 %v528
      %592 = vmatpush1.bf16.msra.mxu0 %v527
      %593 = vmatprep.subr.bf16.mxu0 %v530
      %594 = vmatpush1.bf16.msra.mxu0 %v529
      %595 = vmatprep.subr.bf16.mxu0 %v532
      %596 = vmatpush1.bf16.msra.mxu0 %v531
      %597 = vmatprep.subr.bf16.mxu0 %v534
      %598 = vmatpush1.bf16.msra.mxu0 %v533
      %599 = vmatprep.subr.bf16.mxu0 %v536
      %600 = vmatpush1.bf16.msra.mxu0 %v535
      %601 = vmatprep.subr.bf16.mxu0 %v538
      %602 = vmatpush1.bf16.msra.mxu0 %v537
      %603 = vmatprep.subr.bf16.mxu0 %v540
      %604 = vmatpush1.bf16.msra.mxu0 %v539
      %605 = vmatprep.subr.bf16.mxu0 %v542
      %606 = vmatpush1.bf16.msra.mxu0 %v541
      %607 = vmatprep.subr.bf16.mxu0 %v544
      %608 = vmatpush1.bf16.msra.mxu0 %v543
      %609 = vmatprep.subr.bf16.mxu0 %v546
      %610 = vmatpush1.bf16.msra.mxu0 %v545
      %611 = vmatprep.mubr.bf16.mxu0 %v366
      %612 = vmatmul.mubr.bf16.gmra.mrb[0].mxu0 %v365
      %v613 = vpop.f32.mrb[0].mxu0
      %v614 = vadd.f32 %v417, %v613
      %v615 = vpop.f32.mrb[0].mxu0
      %v616 = vadd.f32 %v418, %v615
      %v617 = vpop.f32.mrb[0].mxu0
      %v618 = vpop.f32.mrb[0].mxu0
      %619 = vdwg.mxu0
      %s620 = scalar_lea.vmem %s5, 1
      %v621 = vld [vmem:[%s620] ss:$8 sm:$0x3]
      %622 = vset.pattern.permute.xlu0 1
      %623 = vperm.xlu0 %622, %v399
      %v624 = vpop.permute.xlu0 %623
      %v627 = vlaneseq
      %v628 = vshrl.u32 %v627, 7
      %v629 = vsub.s32 0, %v628
      %v630 = vrot.slane %v621, %v629
      %v631 = vlaneseq
      %v632 = vshrl.u32 %v631, 7
      %v633 = vsub.s32 1, %v632
      %v634 = vrot.slane %v621, %v633
      %v637 = vmul.f32 %v624, %v630
      %v638 = vmul.f32 %v624, %v634
      %v639 = vadd.f32 %v614, %v637
      %v640 = vadd.f32 %v616, %v638
      %s641 = scalar_lea.vmem %s5, 2
      %v642 = vld [vmem:[%s641] ss:$8 sm:$0x3]
      %643 = vset.pattern.permute.xlu0 2
      %644 = vperm.xlu0 %643, %v399
      %v645 = vpop.permute.xlu0 %644
      %v648 = vlaneseq
      %v649 = vshrl.u32 %v648, 7
      %v650 = vsub.s32 0, %v649
      %v651 = vrot.slane %v642, %v650
      %v652 = vlaneseq
      %v653 = vshrl.u32 %v652, 7
      %v654 = vsub.s32 1, %v653
      %v655 = vrot.slane %v642, %v654
      %v658 = vmul.f32 %v645, %v651
      %v659 = vmul.f32 %v645, %v655
      %v660 = vadd.f32 %v639, %v658
      %v661 = vadd.f32 %v640, %v659
      %s662 = scalar_lea.vmem %s5, 3
      %v663 = vld [vmem:[%s662] ss:$8 sm:$0x3]
      %664 = vset.pattern.permute.xlu0 3
      %665 = vperm.xlu0 %664, %v399
      %v666 = vpop.permute.xlu0 %665
      %v669 = vlaneseq
      %v670 = vshrl.u32 %v669, 7
      %v671 = vsub.s32 0, %v670
      %v672 = vrot.slane %v663, %v671
      %v673 = vlaneseq
      %v674 = vshrl.u32 %v673, 7
      %v675 = vsub.s32 1, %v674
      %v676 = vrot.slane %v663, %v675
      %v679 = vmul.f32 %v666, %v672
      %v680 = vmul.f32 %v666, %v676
      %v681 = vadd.f32 %v660, %v679
      %v682 = vadd.f32 %v661, %v680
      %s683 = scalar_lea.vmem %s5, 4
      %v684 = vld [vmem:[%s683] ss:$8 sm:$0x3]
      %685 = vset.pattern.permute.xlu0 4
      %686 = vperm.xlu0 %685, %v399
      %v687 = vpop.permute.xlu0 %686
      %v690 = vlaneseq
      %v691 = vshrl.u32 %v690, 7
      %v692 = vsub.s32 0, %v691
      %v693 = vrot.slane %v684, %v692
      %v694 = vlaneseq
      %v695 = vshrl.u32 %v694, 7
      %v696 = vsub.s32 1, %v695
      %v697 = vrot.slane %v684, %v696
      %v700 = vmul.f32 %v687, %v693
      %v701 = vmul.f32 %v687, %v697
      %v702 = vadd.f32 %v681, %v700
      %v703 = vadd.f32 %v682, %v701
      %s704 = scalar_lea.vmem %s5, 5
      %v705 = vld [vmem:[%s704] ss:$8 sm:$0x3]
      %706 = vset.pattern.permute.xlu0 5
      %707 = vperm.xlu0 %706, %v399
      %v708 = vpop.permute.xlu0 %707
      %v711 = vlaneseq
      %v712 = vshrl.u32 %v711, 7
      %v713 = vsub.s32 0, %v712
      %v714 = vrot.slane %v705, %v713
      %v715 = vlaneseq
      %v716 = vshrl.u32 %v715, 7
      %v717 = vsub.s32 1, %v716
      %v718 = vrot.slane %v705, %v717
      %v721 = vmul.f32 %v708, %v714
      %v722 = vmul.f32 %v708, %v718
      %v723 = vadd.f32 %v702, %v721
      %v724 = vadd.f32 %v703, %v722
      %s725 = scalar_lea.vmem %s5, 6
      %v726 = vld [vmem:[%s725] ss:$8 sm:$0x3]
      %727 = vset.pattern.permute.xlu0 6
      %728 = vperm.xlu0 %727, %v399
      %v729 = vpop.permute.xlu0 %728
      %v732 = vlaneseq
      %v733 = vshrl.u32 %v732, 7
      %v734 = vsub.s32 0, %v733
      %v735 = vrot.slane %v726, %v734
      %v736 = vlaneseq
      %v737 = vshrl.u32 %v736, 7
      %v738 = vsub.s32 1, %v737
      %v739 = vrot.slane %v726, %v738
      %v742 = vmul.f32 %v729, %v735
      %v743 = vmul.f32 %v729, %v739
      %v744 = vadd.f32 %v723, %v742
      %v745 = vadd.f32 %v724, %v743
      %s746 = scalar_lea.vmem %s5, 7
      %v747 = vld [vmem:[%s746] ss:$8 sm:$0x3]
      %748 = vset.pattern.permute.xlu0 7
      %749 = vperm.xlu0 %748, %v399
      %v750 = vpop.permute.xlu0 %749
      %v753 = vlaneseq
      %v754 = vshrl.u32 %v753, 7
      %v755 = vsub.s32 0, %v754
      %v756 = vrot.slane %v747, %v755
      %v757 = vlaneseq
      %v758 = vshrl.u32 %v757, 7
      %v759 = vsub.s32 1, %v758
      %v760 = vrot.slane %v747, %v759
      %v763 = vmul.f32 %v750, %v756
      %v764 = vmul.f32 %v750, %v760
      %v765 = vadd.f32 %v744, %v763
      %v766 = vadd.f32 %v745, %v764
      %s767 = scalar_lea.vmem %s6, 1
      %v768 = vld [vmem:[%s767] ss:$8 sm:$0x3]
      %v770 = vlaneseq
      %v771 = vshrl.u32 %v770, 7
      %v772 = vsub.s32 0, %v771
      %v773 = vrot.slane %v768, %v772
      %v774 = vlaneseq
      %v775 = vshrl.u32 %v774, 7
      %v776 = vsub.s32 1, %v775
      %v777 = vrot.slane %v768, %v776
      %v780 = vadd.f32 %v765, %v773
      %v781 = vadd.f32 %v766, %v777
      %v782 = vmax.f32 %v780, 0.0
      %v783 = vmax.f32 %v781, 0.0
      %v784 = vpack.c.bf16 %v782, %v782
      %v785 = vpack.c.bf16 %v783, %v783
      %v786 = vld [vmem:[%s4] sm:$0xff]
      %v787 = vld [vmem:[%s4 + $0x8] sm:$0xff]
      %v788 = vld [vmem:[%s4 + $0x10] sm:$0xff]
      %v789 = vld [vmem:[%s4 + $0x18] sm:$0xff]
      %v790 = vld [vmem:[%s4 + $0x20] sm:$0xff]
      %v791 = vld [vmem:[%s4 + $0x28] sm:$0xff]
      %v792 = vld [vmem:[%s4 + $0x30] sm:$0xff]
      %v793 = vld [vmem:[%s4 + $0x38] sm:$0xff]
      %v794 = vld [vmem:[%s4 + $0x40] sm:$0xff]
      %v795 = vld [vmem:[%s4 + $0x48] sm:$0xff]
      %v796 = vld [vmem:[%s4 + $0x50] sm:$0xff]
      %v797 = vld [vmem:[%s4 + $0x58] sm:$0xff]
      %v798 = vld [vmem:[%s4 + $0x60] sm:$0xff]
      %v799 = vld [vmem:[%s4 + $0x68] sm:$0xff]
      %v800 = vld [vmem:[%s4 + $0x70] sm:$0xff]
      %v801 = vld [vmem:[%s4 + $0x78] sm:$0xff]
      %v802 = vld [vmem:[%s4 + $0x80] sm:$0xff]
      %v803 = vld [vmem:[%s4 + $0x88] sm:$0xff]
      %v804 = vld [vmem:[%s4 + $0x90] sm:$0xff]
      %v805 = vld [vmem:[%s4 + $0x98] sm:$0xff]
      %v806 = vld [vmem:[%s4 + $0xa0] sm:$0xff]
      %v807 = vld [vmem:[%s4 + $0xa8] sm:$0xff]
      %v808 = vld [vmem:[%s4 + $0xb0] sm:$0xff]
      %v809 = vld [vmem:[%s4 + $0xb8] sm:$0xff]
      %v810 = vld [vmem:[%s4 + $0xc0] sm:$0xff]
      %v811 = vld [vmem:[%s4 + $0xc8] sm:$0xff]
      %v812 = vld [vmem:[%s4 + $0xd0] sm:$0xff]
      %v813 = vld [vmem:[%s4 + $0xd8] sm:$0xff]
      %v814 = vld [vmem:[%s4 + $0xe0] sm:$0xff]
      %v815 = vld [vmem:[%s4 + $0xe8] sm:$0xff]
      %v816 = vld [vmem:[%s4 + $0xf0] sm:$0xff]
      %v817 = vld [vmem:[%s4 + $0xf8] sm:$0xff]
      %s818 = scalar_lea.vmem %s6, 2
      %v819 = vld [vmem:[%s818] ss:$8 sm:$0x3]
      %v821 = vlaneseq
      %v822 = vshrl.u32 %v821, 7
      %v823 = vsub.s32 0, %v822
      %v824 = vrot.slane %v819, %v823
      %v825 = vlaneseq
      %v826 = vshrl.u32 %v825, 7
      %v827 = vsub.s32 1, %v826
      %v828 = vrot.slane %v819, %v827
      %v863 = vunpack.c.l.b16 %v786
      %v864 = vunpack.c.h.b16 %v786
      %v865 = vunpack.c.l.b16 %v787
      %v866 = vunpack.c.h.b16 %v787
      %v867 = vunpack.c.l.b16 %v788
      %v868 = vunpack.c.h.b16 %v788
      %v869 = vunpack.c.l.b16 %v789
      %v870 = vunpack.c.h.b16 %v789
      %v871 = vunpack.c.l.b16 %v790
      %v872 = vunpack.c.h.b16 %v790
      %v873 = vunpack.c.l.b16 %v791
      %v874 = vunpack.c.h.b16 %v791
      %v875 = vunpack.c.l.b16 %v792
      %v876 = vunpack.c.h.b16 %v792
      %v877 = vunpack.c.l.b16 %v793
      %v878 = vunpack.c.h.b16 %v793
      %v879 = vunpack.c.l.b16 %v794
      %v880 = vunpack.c.h.b16 %v794
      %v881 = vunpack.c.l.b16 %v795
      %v882 = vunpack.c.h.b16 %v795
      %v883 = vunpack.c.l.b16 %v796
      %v884 = vunpack.c.h.b16 %v796
      %v885 = vunpack.c.l.b16 %v797
      %v886 = vunpack.c.h.b16 %v797
      %v887 = vunpack.c.l.b16 %v798
      %v888 = vunpack.c.h.b16 %v798
      %v889 = vunpack.c.l.b16 %v799
      %v890 = vunpack.c.h.b16 %v799
      %v891 = vunpack.c.l.b16 %v800
      %v892 = vunpack.c.h.b16 %v800
      %v893 = vunpack.c.l.b16 %v801
      %v894 = vunpack.c.h.b16 %v801
      %v895 = vunpack.c.l.b16 %v802
      %v896 = vunpack.c.h.b16 %v802
      %v897 = vunpack.c.l.b16 %v803
      %v898 = vunpack.c.h.b16 %v803
      %v899 = vunpack.c.l.b16 %v804
      %v900 = vunpack.c.h.b16 %v804
      %v901 = vunpack.c.l.b16 %v805
      %v902 = vunpack.c.h.b16 %v805
      %v903 = vunpack.c.l.b16 %v806
      %v904 = vunpack.c.h.b16 %v806
      %v905 = vunpack.c.l.b16 %v807
      %v906 = vunpack.c.h.b16 %v807
      %v907 = vunpack.c.l.b16 %v808
      %v908 = vunpack.c.h.b16 %v808
      %v909 = vunpack.c.l.b16 %v809
      %v910 = vunpack.c.h.b16 %v809
      %v911 = vunpack.c.l.b16 %v810
      %v912 = vunpack.c.h.b16 %v810
      %v913 = vunpack.c.l.b16 %v811
      %v914 = vunpack.c.h.b16 %v811
      %v915 = vunpack.c.l.b16 %v812
      %v916 = vunpack.c.h.b16 %v812
      %v917 = vunpack.c.l.b16 %v813
      %v918 = vunpack.c.h.b16 %v813
      %v919 = vunpack.c.l.b16 %v814
      %v920 = vunpack.c.h.b16 %v814
      %v921 = vunpack.c.l.b16 %v815
      %v922 = vunpack.c.h.b16 %v815
      %v923 = vunpack.c.l.b16 %v816
      %v924 = vunpack.c.h.b16 %v816
      %v925 = vunpack.c.l.b16 %v817
      %v926 = vunpack.c.h.b16 %v817
      %v927 = vpack.c.b16 %v865, %v863
      %v928 = vpack.c.b16 %v866, %v864
      %v929 = vpack.c.b16 %v869, %v867
      %v930 = vpack.c.b16 %v870, %v868
      %v931 = vpack.c.b16 %v873, %v871
      %v932 = vpack.c.b16 %v874, %v872
      %v933 = vpack.c.b16 %v877, %v875
      %v934 = vpack.c.b16 %v878, %v876
      %v935 = vpack.c.b16 %v881, %v879
      %v936 = vpack.c.b16 %v882, %v880
      %v937 = vpack.c.b16 %v885, %v883
      %v938 = vpack.c.b16 %v886, %v884
      %v939 = vpack.c.b16 %v889, %v887
      %v940 = vpack.c.b16 %v890, %v888
      %v941 = vpack.c.b16 %v893, %v891
      %v942 = vpack.c.b16 %v894, %v892
      %v943 = vpack.c.b16 %v897, %v895
      %v944 = vpack.c.b16 %v898, %v896
      %v945 = vpack.c.b16 %v901, %v899
      %v946 = vpack.c.b16 %v902, %v900
      %v947 = vpack.c.b16 %v905, %v903
      %v948 = vpack.c.b16 %v906, %v904
      %v949 = vpack.c.b16 %v909, %v907
      %v950 = vpack.c.b16 %v910, %v908
      %v951 = vpack.c.b16 %v913, %v911
      %v952 = vpack.c.b16 %v914, %v912
      %v953 = vpack.c.b16 %v917, %v915
      %v954 = vpack.c.b16 %v918, %v916
      %v955 = vpack.c.b16 %v921, %v919
      %v956 = vpack.c.b16 %v922, %v920
      %v957 = vpack.c.b16 %v925, %v923
      %v958 = vpack.c.b16 %v926, %v924
      %991 = vmatprep.subr.bf16.mxu0 %v928
      %992 = vmatpush1.bf16.msra.mxu0 %v927
      %993 = vmatprep.subr.bf16.mxu0 %v930
      %994 = vmatpush1.bf16.msra.mxu0 %v929
      %995 = vmatprep.subr.bf16.mxu0 %v932
      %996 = vmatpush1.bf16.msra.mxu0 %v931
      %997 = vmatprep.subr.bf16.mxu0 %v934
      %998 = vmatpush1.bf16.msra.mxu0 %v933
      %999 = vmatprep.subr.bf16.mxu0 %v936
      %1000 = vmatpush1.bf16.msra.mxu0 %v935
      %1001 = vmatprep.subr.bf16.mxu0 %v938
      %1002 = vmatpush1.bf16.msra.mxu0 %v937
      %1003 = vmatprep.subr.bf16.mxu0 %v940
      %1004 = vmatpush1.bf16.msra.mxu0 %v939
      %1005 = vmatprep.subr.bf16.mxu0 %v942
      %1006 = vmatpush1.bf16.msra.mxu0 %v941
      %1007 = vmatprep.subr.bf16.mxu0 %v944
      %1008 = vmatpush1.bf16.msra.mxu0 %v943
      %1009 = vmatprep.subr.bf16.mxu0 %v946
      %1010 = vmatpush1.bf16.msra.mxu0 %v945
      %1011 = vmatprep.subr.bf16.mxu0 %v948
      %1012 = vmatpush1.bf16.msra.mxu0 %v947
      %1013 = vmatprep.subr.bf16.mxu0 %v950
      %1014 = vmatpush1.bf16.msra.mxu0 %v949
      %1015 = vmatprep.subr.bf16.mxu0 %v952
      %1016 = vmatpush1.bf16.msra.mxu0 %v951
      %1017 = vmatprep.subr.bf16.mxu0 %v954
      %1018 = vmatpush1.bf16.msra.mxu0 %v953
      %1019 = vmatprep.subr.bf16.mxu0 %v956
      %1020 = vmatpush1.bf16.msra.mxu0 %v955
      %1021 = vmatprep.subr.bf16.mxu0 %v958
      %1022 = vmatpush1.bf16.msra.mxu0 %v957
      %1023 = vmatprep.mubr.bf16.mxu0 %v785
      %1024 = vmatmul.mubr.bf16.gmra.mrb[0].mxu0 %v784
      %v1025 = vpop.f32.mrb[0].mxu0
      %v1026 = vadd.f32 %v824, %v1025
      %v1027 = vpop.f32.mrb[0].mxu0
      %v1028 = vadd.f32 %v828, %v1027
      %v1029 = vpop.f32.mrb[0].mxu0
      %v1030 = vpop.f32.mrb[0].mxu0
      %1031 = vdwg.mxu0
      %v1032 = vmax.f32 %v1026, 0.0
      %v1033 = vmax.f32 %v1028, 0.0
      %s1034 = scalar_lea.vmem %s6, 3
      %v1035 = vld [vmem:[%s1034] ss:$8 sm:$0x3]
      %v1037 = vlaneseq
      %v1038 = vshrl.u32 %v1037, 7
      %v1039 = vsub.s32 0, %v1038
      %v1040 = vrot.slane %v1035, %v1039
      %v1041 = vlaneseq
      %v1042 = vshrl.u32 %v1041, 7
      %v1043 = vsub.s32 1, %v1042
      %v1044 = vrot.slane %v1035, %v1043
      %v1047 = vmul.f32 %v1032, %v1040
      %v1048 = vmul.f32 %v1033, %v1044
      %v1049 = vadd.f32 %v1047, %v1048
      %1050 = vadd.xlane.f32.xlu0 %v1049
      %v1051 = vpop.xlane.xlu0 %1050
      %v1052 = vld [vmem:[%s6 + $0x4] ss:$0 sm:$0xff]
      %v1053 = vadd.f32 %v1051, %v1052
      %vm1054 = vcmask 7168
      %1055 = vst.msk [vmem:[%s290] sm:$0xff] %vm1054, %v1053
      %p1056 = scmp.lt.s32.totalorder %s18, 1
      %s1057 = scalar_select %p1056, %s18, 1
      %s1058 = smul.addr %s1057, 8
      %s1059 = scalar_lea.vmem %s7, %s1058
      // Predicated region
      $region49: #{critic_forward.1} parent=47 // pred_check
        %p1060 = pneg %p193
      $region50: #{critic_forward.1} parent=47 // pred_check_branch
        %1062 = sbr.rel (%p1060) target = $region52
      $region51: #{critic_forward.1} parent=47 // pred_region
        _
      $region52: #{critic_forward.1} parent=47 // pred_fallthru
        _
    $region48: #{critic_forward.1} parent=5 // pred_fallthru
      _
    %p1063 = scmp.le.s32.totalorder 2, %s13
    // Predicated region
    $region53: #{critic_forward.1} parent=5 // pred_check
      %p1064 = pneg %p1063
    $region54: #{critic_forward.1} parent=5 // pred_check_branch
      %1066 = sbr.rel (%p1064) target = $region56
    $region55: #{critic_forward.1} parent=5 // pred_region
      %s1067 = ssub.s32 %s13, 2
      // Predicated region
      $region57: #{critic_forward.1} parent=55 // pred_check
        %p1068 = pneg %p199
      $region58: #{critic_forward.1} parent=55 // pred_check_branch
        %1070 = sbr.rel (%p1068) target = $region60
      $region59: #{critic_forward.1} parent=55 // pred_region
        %p1071 = scmp.lt.s32.totalorder %s19, 1
        %s1072 = scalar_select %p1071, %s19, 1
        %s1073 = smul.addr %s1072, 8
        %s1074 = scalar_lea.vmem %s7, %s1073
      $region60: #{critic_forward.1} parent=55 // pred_fallthru
        _
    $region56: #{critic_forward.1} parent=5 // pred_fallthru
      _
  $region6: #{critic_forward.1} parent=0 // loop_footer
    %s17 = sadd.s32 1, %s13
  $region7: #{critic_forward.1} parent=0 // loop_footer_branch
    %12 = sbr.rel target = $region3
  $region8: #{critic_forward.1} parent=0 // loop_exit
    _

</llo_original>
